<compile_context>
chip_gen: v5e
topology: v5e:2x2
jax: 0.10.0
libtpu: 0.0.40
codegen_flags: <defaults>
</compile_context>

<pallas_src>
import numpy as np
import jax
import jax.numpy as jnp
from jax.experimental import pallas as pl
from jax.experimental.pallas import tpu as pltpu


# ----------------------------------------------------------------------------
# State-space / impulse setup (mirrors LMUFFTCell.__init__, done in NumPy f64)
# ----------------------------------------------------------------------------
def _expm_np(M):
    """Matrix exponential via scaling-and-squaring + Taylor (float64)."""
    norm = np.linalg.norm(M, ord=np.inf)
    k = 0 if norm < 0.5 else int(np.ceil(np.log2(norm / 0.5)))
    Ms = M / (2.0 ** k)
    n = M.shape[0]
    E = np.eye(n)
    term = np.eye(n)
    for i in range(1, 30):
        term = term @ Ms / i
        E = E + term
    for _ in range(k):
        E = E @ E
    return E


def state_space_matrices(memory_size, theta):
    """Continuous LMU A, B discretized with zero-order hold (dt = 1)."""
    Q = np.arange(memory_size, dtype=np.float64).reshape(-1, 1)
    R = (2 * Q + 1) / theta
    i, j = np.meshgrid(Q, Q, indexing="ij")
    A = R * np.where(i < j, -1.0, (-1.0) ** (i - j + 1))
    B = R * (-1.0) ** Q
    M = memory_size
    aug = np.zeros((M + 1, M + 1), dtype=np.float64)
    aug[:M, :M] = A
    aug[:M, M:M + 1] = B
    EM = _expm_np(aug)
    return EM[:M, :M], EM[:M, M:M + 1]


def impulse(Ad, Bd, seq_len):
    """H[:, t] = A^t @ B, shape [memory_size, seq_len] (Eq. 23 of the paper)."""
    M = Ad.shape[0]
    cols = []
    A_i = np.eye(M)
    for _ in range(seq_len):
        cols.append(A_i @ Bd)
        A_i = Ad @ A_i
    return np.concatenate(cols, axis=-1)  # [M, S]


def folded_toeplitz_operator(H, whm_pad, seq_len):
    """G_h[s, t*Hp + j] = (whm_pad @ H[:, t-s])[j] for t >= s, else 0. Shape [S, S*Hp]."""
    Hp = whm_pad.shape[0]
    P = whm_pad @ H                                    # [Hp, S]
    Gh = np.zeros((seq_len, seq_len, Hp), dtype=np.float64)
    for s in range(seq_len):
        for t in range(s, seq_len):
            Gh[s, t, :] = P[:, t - s]
    return Gh.reshape(seq_len, seq_len * Hp)


def _round_up(v, m):
    return ((v + m - 1) // m) * m


# ----------------------------------------------------------------------------
# Stage 1: u = ReLU(W_u x + b_u), computed once over the whole sequence
# ----------------------------------------------------------------------------
def _u_kernel(x_ref, wu_ref, bu_ref, u_ref):
    d = x_ref.shape[-1]
    x = x_ref[...]                                   # [bt, S, D]
    w = wu_ref[...].reshape(1, 1, d)                 # [1, 1, D]
    u = jnp.maximum(jnp.sum(x * w, axis=-1) + bu_ref[0, 0], 0.0)
    u_ref[...] = u.astype(u_ref.dtype)               # bf16 for the MXU matmul


# ----------------------------------------------------------------------------
# Stage 2: h = ReLU(u @ G_h + x @ W_hx + b_h); grid = (time tiles, batch tiles)
# ----------------------------------------------------------------------------
def _lmu_main_kernel(u_ref, xt_ref, gh_ref, whx_ref, bh_ref, h_ref):
    bt, tt, d = xt_ref.shape
    hp = whx_ref.shape[1]

    # Memory-path contribution: one MXU matmul against the W_h-folded causal
    # Toeplitz operator slab (bf16 operands, f32 accumulation). Result is
    # already in the lane-dense [bt, tt*Hp] store layout — no relayout.
    mh = jnp.dot(u_ref[...], gh_ref[...], preferred_element_type=jnp.float32)

    # Input-path contribution + bias in its natural [bt*tt, Hp] layout; only
    # this small term gets a single relayout into the store layout.
    xt = xt_ref[...].reshape(bt * tt, d)
    hx = jnp.dot(xt, whx_ref[...], preferred_element_type=jnp.float32) + bh_ref[...]

    h_ref[...] = jnp.maximum(mh + hx.reshape(bt, tt * hp), 0.0)


def _pick_time_tile(S, Hp, bt, D, op_bytes, budget):
    """Largest time tile (divisor of S, multiple of 8 or == S) fitting the VMEM budget."""
    cands = {S}
    t = (S // 8) * 8
    while t >= 8:
        if S % t == 0:
            cands.add(t)
        t -= 8
    smallest = min(cands)
    for tt in sorted(cands, reverse=True):
        need = (2 * S * tt * Hp * op_bytes      # double-buffered G_h slab (dominant)
                + 2 * bt * tt * Hp * 4          # double-buffered h output tile
                + 2 * bt * S * op_bytes         # u block
                + 2 * bt * tt * D * 4           # x time tile
                + D * Hp * 4 + Hp * 4)          # weights / bias
        if need <= budget:
            return tt
    return smallest


def lmu_fft_forward(x, wu, bu, gh, whx_pad, bh_pad, *, hidden_size,
                    batch_tile=None, time_tile=None,
                    vmem_budget_bytes=40 * 1024 * 1024):
    B, S, D = x.shape
    Hp = whx_pad.shape[1]
    assert gh.shape == (S, S * Hp)

    # Pad batch to a sublane multiple: MXU M-dim >= 8 and valid batch tiles.
    Bp = max(8, _round_up(B, 8))
    if Bp != B:
        x = jnp.pad(x, ((0, Bp - B), (0, 0), (0, 0)))

    # Batch tile: whole padded batch by default (capped for very large batches).
    if batch_tile is None:
        bt = Bp
        for cand in (512, 256, 128):
            if Bp > cand and Bp % cand == 0:
                bt = cand
                break
    else:
        bt = batch_tile
    assert Bp % bt == 0 and (bt == Bp or bt % 8 == 0)

    op_bytes = jnp.dtype(gh.dtype).itemsize
    tt = _pick_time_tile(S, Hp, bt, D, op_bytes, vmem_budget_bytes) \
        if time_tile is None else time_tile
    assert S % tt == 0 and (tt == S or tt % 8 == 0)
    nb, nt = Bp // bt, S // tt

    # ---- stage 1: u (computed once; emitted in the operator dtype) ---------
    u = pl.pallas_call(
        _u_kernel,
        out_shape=jax.ShapeDtypeStruct((Bp, S), gh.dtype),
        grid=(nb,),
        in_specs=[
            pl.BlockSpec((bt, S, D), lambda bi: (bi, 0, 0)),        # x (full seq)
            pl.BlockSpec((1, D), lambda bi: (0, 0)),                # W_u
            pl.BlockSpec(memory_space=pltpu.MemorySpace.SMEM),      # b_u scalar
        ],
        out_specs=pl.BlockSpec((bt, S), lambda bi: (bi, 0)),
        compiler_params=pltpu.CompilerParams(
            dimension_semantics=("parallel",)),
    )(x, wu, bu)

    # ---- stage 2: main matmul; time OUTER so the G_h slab (index depends only
    # on the outer axis) is not re-DMA'd across consecutive batch tiles -------
    h2d = pl.pallas_call(
        _lmu_main_kernel,
        out_shape=jax.ShapeDtypeStruct((Bp, S * Hp), jnp.float32),
        grid=(nt, nb),
        in_specs=[
            pl.BlockSpec((bt, S), lambda ti, bi: (bi, 0)),          # u (full seq)
            pl.BlockSpec((bt, tt, D), lambda ti, bi: (bi, ti, 0)),  # x time tile
            pl.BlockSpec((S, tt * Hp), lambda ti, bi: (0, ti)),     # folded Toeplitz slab
            pl.BlockSpec((D, Hp), lambda ti, bi: (0, 0)),           # W_h input part (padded)
            pl.BlockSpec((1, Hp), lambda ti, bi: (0, 0)),           # b_h (padded)
        ],
        out_specs=pl.BlockSpec((bt, tt * Hp), lambda ti, bi: (bi, ti)),
        compiler_params=pltpu.CompilerParams(
            dimension_semantics=("parallel", "parallel"),
            # Fits v7x's 64 MiB physical VMEM with headroom; raise on v6e/v5e
            # (128 MiB physical) together with vmem_budget_bytes for bigger tiles.
            vmem_limit_bytes=max(vmem_budget_bytes + (8 << 20), 32 << 20),
        ),
    )(u, x, gh, whx_pad, bh_pad)

    h = h2d.reshape(Bp, S, Hp)[:B, :, :hidden_size]
    h_n = h[:, -1, :]
    return h, h_n


# ----------------------------------------------------------------------------
# Float64 NumPy reference following the PyTorch module's FFT path exactly
# ----------------------------------------------------------------------------
def reference_numpy(x, wu, bu, H, wh, bh, seq_len):
    x64 = np.asarray(x, np.float64)
    wu64 = np.asarray(wu, np.float64)            # [1, D]
    bu64 = np.asarray(bu, np.float64)            # [1, 1]
    u = np.maximum(x64 @ wu64.T + bu64.reshape(1, 1, 1), 0.0)            # [B, S, 1]
    fft_u = np.fft.rfft(u.transpose(0, 2, 1), n=2 * seq_len, axis=-1)    # [B, 1, S+1]
    fft_H = np.fft.rfft(H, n=2 * seq_len, axis=-1)                       # [M, S+1]
    temp = fft_u * fft_H[None]
    m = np.fft.irfft(temp, n=2 * seq_len, axis=-1)[:, :, :seq_len]
    m = m.transpose(0, 2, 1)                                             # [B, S, M]
    input_h = np.concatenate([m, x64], axis=-1)
    h = np.maximum(input_h @ np.asarray(wh, np.float64).T + np.asarray(bh, np.float64), 0.0)
    return h, h[:, -1, :]


if __name__ == "__main__":
    # Module hyper-parameters (small, consistent with the forward pass)
    input_size = 4
    hidden_size = 32
    memory_size = 16
    seq_len = 8
    theta = 8.0
    batch = 2

    # Deterministic buffers (A, B, H) — buffers are .float() in torch.
    Ad, Bd = state_space_matrices(memory_size, theta)
    Ad = Ad.astype(np.float32).astype(np.float64)
    Bd = Bd.astype(np.float32).astype(np.float64)
    H_np = impulse(Ad, Bd, seq_len)                         # [M, S]

    # Deterministic parameter init (synthetic, not a checkpoint load)
    key = jax.random.PRNGKey(0)
    k1, k2, k3, k4, kx = jax.random.split(key, 5)
    wu = jax.random.normal(k1, (1, input_size), jnp.float32) * 0.5           # W_u  [1, D]
    bu = jax.random.normal(k2, (1, 1), jnp.float32) * 0.1                    # b_u  [1, 1]
    wh = jax.random.normal(k3, (hidden_size, memory_size + input_size), jnp.float32) * 0.2
    bh = jax.random.normal(k4, (1, hidden_size), jnp.float32) * 0.1          # b_h  [1, Hd]
    x = jax.random.normal(kx, (batch, seq_len, input_size), jnp.float32)

    # Pad hidden to a lane-dense multiple of 128 and fold W_h's memory part
    # into the causal Toeplitz operator; store the operator in bf16 (f32 accum
    # in-kernel) — it is the dominant HBM/VMEM stream.
    Hp = ((hidden_size + 127) // 128) * 128
    wh_np = np.asarray(wh, np.float64)
    whm = wh_np[:, :memory_size]                 # [Hd, M]
    whx = wh_np[:, memory_size:]                 # [Hd, D]

    whm_pad = np.zeros((Hp, memory_size), dtype=np.float64)
    whm_pad[:hidden_size] = whm
    Gh_np = folded_toeplitz_operator(H_np, whm_pad, seq_len)   # [S, S*Hp]
    Gh = jnp.asarray(Gh_np, jnp.bfloat16)

    whx_pad_np = np.zeros((input_size, Hp), dtype=np.float64)
    whx_pad_np[:, :hidden_size] = whx.T
    whx_pad = jnp.asarray(whx_pad_np, jnp.float32)

    bh_pad_np = np.zeros((1, Hp), dtype=np.float64)
    bh_pad_np[:, :hidden_size] = np.asarray(bh, np.float64)
    bh_pad = jnp.asarray(bh_pad_np, jnp.float32)

    # Run the kernels
    h, h_n = lmu_fft_forward(x, wu, bu, Gh, whx_pad, bh_pad,
                             hidden_size=hidden_size)
    h = jax.block_until_ready(h)
    h_n = jax.block_until_ready(h_n)

    # Validate against the FFT reference (float64 NumPy). Tolerance is looser
    # than the previous f32-operator revision because G_h / u are bf16 on the
    # MXU (accumulation stays f32).
    h_ref, h_n_ref = reference_numpy(np.asarray(x), np.asarray(wu), np.asarray(bu),
                                     H_np, np.asarray(wh), np.asarray(bh), seq_len)
    assert h.shape == (batch, seq_len, hidden_size)
    assert h_n.shape == (batch, hidden_size)
    assert np.allclose(np.asarray(h), h_ref, atol=3e-2, rtol=3e-2)
    assert np.allclose(np.asarray(h_n), h_n_ref, atol=3e-2, rtol=3e-2)

    print("KERNEL_OK")
</pallas_src>

<mosaic_0001>
module attributes {stable_mosaic.version = 11 : i64} {
  func.func @_u_kernel(%arg0: i32, %arg1: memref<8x8x4xf32, #tpu.memory_space<vmem>>, %arg2: memref<1x4xf32, #tpu.memory_space<vmem>>, %arg3: memref<1x1xf32, #tpu.memory_space<smem>>, %arg4: memref<8x8xbf16, #tpu.memory_space<vmem>>) attributes {dimension_semantics = [#tpu.dimension_semantics<parallel>], iteration_bounds = array<i64: 1>, scalar_prefetch = 0 : i64, scratch_operands = 0 : i64, tpu.core_type = #tpu.core_type<tc>, window_params = [{transform_indices = @transform_0, window_bounds = array<i64: 8, 8, 4>}, {pipeline_mode = #tpu.pipeline_mode<synchronous>, transform_indices = @transform_1, window_bounds = array<i64: 1, 4>}, {transform_indices = @transform_2, window_bounds = array<i64: 1, 1>}, {transform_indices = @transform_3, window_bounds = array<i64: 8, 8>}]} {
    %c0 = arith.constant 0 : index
    %c0_0 = arith.constant 0 : index
    %c0_1 = arith.constant 0 : index
    %0 = vector.load %arg1[%c0, %c0_0, %c0_1] : memref<8x8x4xf32, #tpu.memory_space<vmem>>, vector<8x8x4xf32>
    %c0_2 = arith.constant 0 : index
    %c0_3 = arith.constant 0 : index
    %1 = vector.load %arg2[%c0_2, %c0_3] : memref<1x4xf32, #tpu.memory_space<vmem>>, vector<1x4xf32>
    %2 = vector.shape_cast %1 : vector<1x4xf32> to vector<1x1x4xf32>
    %3 = vector.broadcast %2 : vector<1x1x4xf32> to vector<8x8x4xf32>
    %4 = arith.mulf %0, %3 : vector<8x8x4xf32>
    %cst = arith.constant dense<0.000000e+00> : vector<8x8xf32>
    %5 = vector.multi_reduction <add>, %4, %cst [2] : vector<8x8x4xf32> to vector<8x8xf32>
    %c0_4 = arith.constant 0 : index
    %c0_5 = arith.constant 0 : index
    %6 = memref.load %arg3[%c0_4, %c0_5] : memref<1x1xf32, #tpu.memory_space<smem>>
    %7 = vector.broadcast %6 : f32 to vector<8x8xf32>
    %8 = arith.addf %5, %7 : vector<8x8xf32>
    %cst_6 = arith.constant 0.000000e+00 : f32
    %9 = vector.broadcast %cst_6 : f32 to vector<8x8xf32>
    %10 = arith.maximumf %8, %9 : vector<8x8xf32>
    %11 = arith.truncf %10 : vector<8x8xf32> to vector<8x8xbf16>
    %c0_7 = arith.constant 0 : index
    %c0_8 = arith.constant 0 : index
    %12 = vector.load %arg4[%c0_7, %c0_8] : memref<8x8xbf16, #tpu.memory_space<vmem>>, vector<8x8xbf16>
    tpu.vector_store %arg4[%c0_7, %c0_8], %11 {strides = array<i32>} : memref<8x8xbf16, #tpu.memory_space<vmem>>, vector<8x8xbf16>,
    return
  }
  func.func @transform_0(%arg0: i32) -> (i32, i32, i32) {
    %c0_i32 = arith.constant 0 : i32
    %c0_i32_0 = arith.constant 0 : i32
    %c0_i32_1 = arith.constant 0 : i32
    return %arg0, %c0_i32, %c0_i32_0 : i32, i32, i32
  }
  func.func @transform_1(%arg0: i32) -> (i32, i32) {
    %c0_i32 = arith.constant 0 : i32
    %c0_i32_0 = arith.constant 0 : i32
    %c0_i32_1 = arith.constant 0 : i32
    return %c0_i32, %c0_i32_0 : i32, i32
  }
  func.func @transform_2(%arg0: i32) -> (i32, i32) {
    %c0_i32 = arith.constant 0 : i32
    %c0_i32_0 = arith.constant 0 : i32
    %c0_i32_1 = arith.constant 0 : i32
    return %c0_i32, %c0_i32_0 : i32, i32
  }
  func.func @transform_3(%arg0: i32) -> (i32, i32) {
    %c0_i32 = arith.constant 0 : i32
    %c0_i32_0 = arith.constant 0 : i32
    return %arg0, %c0_i32 : i32, i32
  }
}

</mosaic_0001>

<llo_original>
// kernel: tpu_custom_call.1
$region0: #{tpu_custom_call.1}
  #allocation0 [shape = 'u32[]', space=smem, size = 0x4, offset = 0x4, fixed_abs, tag = 'smem constant byte address 0x4 - core index']
  #allocation1 [shape = 'u32[72,128]{1,0:T(1,128)}', space=vmem, size = 0x9000, scoped, tag = 'internal scratch']
  #allocation2 [shape = 'f32[1,1]{1,0:T(1,128)S(6)}', space=smem, size = 0x200, scoped, tag = 'scoped memory for tpu_custom_call.1']
  %s0 = inlined_call_operand.vmem [shape: f32[8,8,4], index: 0, kind: input, shape index: {}]
  %s1 = inlined_call_operand.vmem [shape: f32[1,4], index: 1, kind: input, shape index: {}]
  %s2 = inlined_call_operand.<no memory space> [shape: f32[1,1], index: 2, kind: input, shape index: {}]
  %s3 = inlined_call_operand.hbm [shape: bf16[8,8], index: 3, kind: output, shape index: {}]
  %s4 = sld [smem:[#allocation0]]
  $region22: #{tpu_custom_call.1} parent=0
    _
  %s6 = ssub.s32 1, %s4
  %s7 = scalar_select 0, %s6, %s4
  %8 = sst [smem:[#allocation2]] %s2
  $region1: #{tpu_custom_call.1} parent=0
    #allocation3 [shape = 'u8[2048]{0}', space=vmem, size = 0x800, scoped, tag = 'output window, operand 0, single buffered']
    #allocation4 [shape = 's32[1]{0}', space=sflag, size = 0x4, scoped, tag = 'scoped memory for tpu_custom_call.1']
    %9 = vsyncpa [#allocation4], 0
    // Predicated region
    $region2: #{tpu_custom_call.1} parent=1 // pred_check
      _
    $region3: #{tpu_custom_call.1} parent=1 // pred_check_branch
      %11 = sbr.rel (0) target = $region5
    $region4: #{tpu_custom_call.1} parent=1 // pred_region
      _
    $region5: #{tpu_custom_call.1} parent=1 // pred_fallthru
      _
    // Predicated region
    $region6: #{tpu_custom_call.1} parent=1 // pred_check
      _
    $region7: #{tpu_custom_call.1} parent=1 // pred_check_branch
      %13 = sbr.rel (0) target = $region9
    $region8: #{tpu_custom_call.1} parent=1 // pred_region
      _
    $region9: #{tpu_custom_call.1} parent=1 // pred_fallthru
      _
    // Predicated region
    $region10: #{tpu_custom_call.1} parent=1 // pred_check
      _
    $region11: #{tpu_custom_call.1} parent=1 // pred_check_branch
      %15 = sbr.rel (0) target = $region13
    $region12: #{tpu_custom_call.1} parent=1 // pred_region
      _
    $region13: #{tpu_custom_call.1} parent=1 // pred_fallthru
      _
    %v16 = vld [vmem:[%s0] sm:$0xff]
    %v17 = vld [vmem:[%s0 + $0x8] sm:$0xff]
    %v18 = vld [vmem:[%s0 + $0x10] sm:$0xff]
    %v19 = vld [vmem:[%s0 + $0x18] sm:$0xff]
    %v20 = vld [vmem:[%s0 + $0x20] sm:$0xff]
    %v21 = vld [vmem:[%s0 + $0x28] sm:$0xff]
    %v22 = vld [vmem:[%s0 + $0x30] sm:$0xff]
    %v23 = vld [vmem:[%s0 + $0x38] sm:$0xff]
    %v24 = vld [vmem:[%s1] sm:$0x1]
    %v26 = vperm.slane %v24, 0
    %v28 = vmul.f32 %v16, %v26
    %v29 = vmul.f32 %v17, %v26
    %v30 = vmul.f32 %v18, %v26
    %v31 = vmul.f32 %v19, %v26
    %v32 = vmul.f32 %v20, %v26
    %v33 = vmul.f32 %v21, %v26
    %v34 = vmul.f32 %v22, %v26
    %v35 = vmul.f32 %v23, %v26
    %vm36 = vcmask 31744
    %v37 = vsel %vm36, %v28, 0.0
    %38 = vadd.xlane.f32.xlu0 %v37
    %v39 = vpop.xlane.xlu0 %38
    %v40 = vsel %vm36, %v29, 0.0
    %41 = vadd.xlane.f32.xlu0 %v40
    %v42 = vpop.xlane.xlu0 %41
    %v43 = vsel %vm36, %v30, 0.0
    %44 = vadd.xlane.f32.xlu0 %v43
    %v45 = vpop.xlane.xlu0 %44
    %v46 = vsel %vm36, %v31, 0.0
    %47 = vadd.xlane.f32.xlu0 %v46
    %v48 = vpop.xlane.xlu0 %47
    %v49 = vsel %vm36, %v32, 0.0
    %50 = vadd.xlane.f32.xlu0 %v49
    %v51 = vpop.xlane.xlu0 %50
    %v52 = vsel %vm36, %v33, 0.0
    %53 = vadd.xlane.f32.xlu0 %v52
    %v54 = vpop.xlane.xlu0 %53
    %v55 = vsel %vm36, %v34, 0.0
    %56 = vadd.xlane.f32.xlu0 %v55
    %v57 = vpop.xlane.xlu0 %56
    %v58 = vsel %vm36, %v35, 0.0
    %59 = vadd.xlane.f32.xlu0 %v58
    %v60 = vpop.xlane.xlu0 %59
    %s61 = sld [smem:[#allocation2]]
    %v62 = vstv %s61
    %v63 = vadd.f32 %v39, %v62
    %v64 = vadd.f32 %v42, %v62
    %v65 = vadd.f32 %v45, %v62
    %v66 = vadd.f32 %v48, %v62
    %v67 = vadd.f32 %v51, %v62
    %v68 = vadd.f32 %v54, %v62
    %v69 = vadd.f32 %v57, %v62
    %v70 = vadd.f32 %v60, %v62
    %v71 = vmax.f32 %v63, 0.0
    %v72 = vmax.f32 %v64, 0.0
    %v73 = vmax.f32 %v65, 0.0
    %v74 = vmax.f32 %v66, 0.0
    %v75 = vmax.f32 %v67, 0.0
    %v76 = vmax.f32 %v68, 0.0
    %v77 = vmax.f32 %v69, 0.0
    %v78 = vmax.f32 %v70, 0.0
    %v79 = vpack.c.bf16 %v71, %v71
    %v80 = vpack.c.bf16 %v72, %v72
    %v81 = vpack.c.bf16 %v73, %v73
    %v82 = vpack.c.bf16 %v74, %v74
    %v83 = vpack.c.bf16 %v75, %v75
    %v84 = vpack.c.bf16 %v76, %v76
    %v85 = vpack.c.bf16 %v77, %v77
    %v86 = vpack.c.bf16 %v78, %v78
    %v95 = vunpack.c.l.b16 %v79
    %v96 = vunpack.c.l.b16 %v80
    %v97 = vunpack.c.l.b16 %v81
    %v98 = vunpack.c.l.b16 %v82
    %v99 = vunpack.c.l.b16 %v83
    %v100 = vunpack.c.l.b16 %v84
    %v101 = vunpack.c.l.b16 %v85
    %v102 = vunpack.c.l.b16 %v86
    %v103 = vlaneseq
    %v104 = vand.u32 %v103, 127
    %v105 = vperm.slane %v95, %v104
    %v106 = vperm.slane %v96, %v104
    %v107 = vperm.slane %v97, %v104
    %v108 = vperm.slane %v98, %v104
    %v109 = vperm.slane %v99, %v104
    %v110 = vperm.slane %v100, %v104
    %v111 = vperm.slane %v101, %v104
    %v112 = vperm.slane %v102, %v104
    %vm113 = vcmask 1041409
    %v114 = vsel %vm113, %v106, %v105
    %vm115 = vcmask 1042434
    %v116 = vsel %vm115, %v107, %v114
    %vm117 = vcmask 1043459
    %v118 = vsel %vm117, %v108, %v116
    %vm119 = vcmask 1044484
    %v120 = vsel %vm119, %v109, %v118
    %vm121 = vcmask 1045509
    %v122 = vsel %vm121, %v110, %v120
    %vm123 = vcmask 1046534
    %v124 = vsel %vm123, %v111, %v122
    %vm125 = vcmask 1047559
    %v126 = vsel %vm125, %v112, %v124
    %v127 = vpack.c.b16 %v126, %v126
    %vm129 = vcmask 60416
    %130 = vst.msk [vmem:[#allocation3] sm:$0xf] %vm129, %v127
    // Predicated region
    $region14: #{tpu_custom_call.1} parent=1 // pred_check
      _
    $region15: #{tpu_custom_call.1} parent=1 // pred_check_branch
      %132 = sbr.rel (0) target = $region17
    $region16: #{tpu_custom_call.1} parent=1 // pred_region
      %134 = vsyncadd [#allocation4], 0
      %s136 = sshll.u32 [#allocation3], 4
      %s137 = int_to_ptr.vmem [resolvable:$true] %s136
      %s138 = sshll.u32 %s3, 4
      %s139 = int_to_ptr.hbm [resolvable:$true] %s138
      %141 = dma.vmem_to_hbm [thread:$0]  %s137, 64, %s139, [#allocation4]
    $region17: #{tpu_custom_call.1} parent=1 // pred_fallthru
      _
    // Predicated region
    $region18: #{tpu_custom_call.1} parent=1 // pred_check
      _
    $region19: #{tpu_custom_call.1} parent=1 // pred_check_branch
      %143 = sbr.rel (0) target = $region21
    $region20: #{tpu_custom_call.1} parent=1 // pred_region
      %145 = dma.done [#allocation4], 64
    $region21: #{tpu_custom_call.1} parent=1 // pred_fallthru
      _
    %146 = vsyncpa [#allocation4], 1

</llo_original>
